<compile_context>
chip_gen: v7x
topology: tpu7x:2x2x1
jax: 0.10.0
libtpu: 0.0.40
codegen_flags: <defaults>
</compile_context>

<pallas_src>
import functools
import math

import jax
import jax.numpy as jnp
from jax.experimental import pallas as pl
from jax.experimental.pallas import tpu as pltpu


def _round_up(x: int, m: int) -> int:
    return (x + m - 1) // m * m


def _ffn_kernel(drop_thresh, inv_keep, apply_dropout, d_ff_padded,
                seed_ref, x_ref, w1_ref, b1_ref, w2_ref, b2_ref, o_ref, acc_ref):
    """Grid = (token tiles, d_ff chunks).  One (tile_t, tile_f) hidden chunk per step:
       h = relu(x @ w1_chunk + b1_chunk) -> dropout -> acc += h @ w2_chunk."""
    j = pl.program_id(1)

    @pl.when(j == 0)
    def _():
        acc_ref[...] = jnp.zeros_like(acc_ref)

    x = x_ref[...]                                               # (tile_t, d_model_p)

    # linear_1 chunk + ReLU (f32 accumulation on the MXU).
    h = jnp.dot(x, w1_ref[...], preferred_element_type=jnp.float32)
    h = h + b1_ref[...].astype(jnp.float32)                      # (tile_t, tile_f)
    h = jnp.maximum(h, 0.0)

    if apply_dropout:
        # Portable counter-based hash PRNG (splitmix32-style): unique stream per
        # (seed, global row, global col); integer-threshold keep mask, one scale.
        tile_t, tile_f = h.shape
        i = pl.program_id(0)
        row = jax.lax.broadcasted_iota(jnp.int32, h.shape, 0) + i * tile_t
        col = jax.lax.broadcasted_iota(jnp.int32, h.shape, 1) + j * tile_f
        idx = (row * d_ff_padded + col).astype(jnp.uint32)
        seed_u = seed_ref[0].astype(jnp.uint32)
        v = idx ^ (seed_u * jnp.uint32(0x9E3779B9))
        v = (v ^ (v >> 16)) * jnp.uint32(0x7FEB352D)
        v = (v ^ (v >> 15)) * jnp.uint32(0x846CA68B)
        v = v ^ (v >> 16)
        keep = v >= jnp.uint32(drop_thresh)
        h = jnp.where(keep, h, 0.0) * inv_keep

    # linear_2 chunk, accumulated in f32 across the d_ff grid axis.
    acc_ref[...] += jnp.dot(h.astype(w2_ref.dtype), w2_ref[...],
                            preferred_element_type=jnp.float32)

    @pl.when(j == pl.num_programs(1) - 1)
    def _():
        o_ref[...] = (acc_ref[...] + b2_ref[...].astype(jnp.float32)).astype(o_ref.dtype)


def feed_forward_block(x, w1, b1, w2, b2, *,
                       dropout_p: float = 0.0,
                       training: bool = False,
                       seed: int = 0):
    """Pallas equivalent of FeedForwardBlock.forward:
       (x @ w1 + b1) -> ReLU -> dropout -> (@ w2 + b2).
       w1: (d_model, d_ff), w2: (d_ff, d_model) (i.e. torch weights pre-transposed)."""
    d_model = x.shape[-1]
    d_ff = w1.shape[-1]
    assert w1.shape == (d_model, d_ff)
    assert b1.shape == (d_ff,)
    assert w2.shape == (d_ff, d_model)
    assert b2.shape == (d_model,)

    orig_shape = x.shape
    x2 = x.reshape(-1, d_model)
    n = x2.shape[0]

    # ---- tiling decisions ---------------------------------------------------
    dm_p = _round_up(d_model, 128)                 # lane-dense output (unmasked vst)
    tile_f = 512 if d_ff >= 512 else _round_up(d_ff, 128)
    dff_p = _round_up(d_ff, tile_f)

    if n >= 1024 and d_ff <= 2048:
        tile_t = 512                               # amortize ~0.35us/step when d_ff small
    elif n >= 256:
        tile_t = 256
    else:
        tile_t = _round_up(n, 16)
    # keep >= 2 token tiles so dimension_semantics=("parallel", ...) feeds both v7x TCs
    while tile_t > 256 and -(-n // tile_t) < 2:
        tile_t //= 2
    n_pad = _round_up(n, tile_t)

    # ---- zero padding (exact: padded rows/cols contribute nothing) -----------
    pad_t, pad_m, pad_f = n_pad - n, dm_p - d_model, dff_p - d_ff
    if pad_t or pad_m:
        x2 = jnp.pad(x2, ((0, pad_t), (0, pad_m)))
    w1p = jnp.pad(w1, ((0, pad_m), (0, pad_f))) if (pad_m or pad_f) else w1
    b1p = (jnp.pad(b1, ((0, pad_f),)) if pad_f else b1).reshape(1, dff_p)
    w2p = jnp.pad(w2, ((0, pad_f), (0, pad_m))) if (pad_f or pad_m) else w2
    b2p = (jnp.pad(b2, ((0, pad_m),)) if pad_m else b2).reshape(1, dm_p)
    seed_arr = jnp.asarray([seed], dtype=jnp.int32)

    apply_dropout = bool(training) and float(dropout_p) > 0.0
    drop_thresh = min(int(round(float(dropout_p) * 4294967296.0)), 4294967295)
    inv_keep = 1.0 / (1.0 - float(dropout_p)) if apply_dropout else 1.0
    kernel = functools.partial(_ffn_kernel, drop_thresh, inv_keep,
                               apply_dropout, dff_p)

    # ---- VMEM budget (Pallas double-buffers every input block by default) ----
    dsize = jnp.dtype(x.dtype).itemsize
    wsize = jnp.dtype(w1.dtype).itemsize
    vmem_needed = (
        2 * tile_t * dm_p * dsize                    # x blocks
        + 2 * (dm_p * tile_f + tile_f) * wsize       # w1 + b1 chunk blocks
        + 2 * (tile_f * dm_p + dm_p) * wsize         # w2 + b2 blocks
        + 2 * tile_t * dm_p * dsize                  # output blocks
        + tile_t * dm_p * 4                          # f32 accumulator scratch
        + 4 * tile_t * tile_f * 4                    # hidden chunk + dropout temps (f32)
    )
    try:  # generation-aware cap (v7x: 64 MiB physical VMEM vs 128 MiB on v5e/v6e)
        vmem_cap = int(0.9 * pltpu.get_tpu_info().vmem_capacity_bytes)
    except Exception:
        vmem_cap = 64 * 1024 * 1024
    vmem_limit = int(min(max(int(1.5 * vmem_needed), 32 * 1024 * 1024), vmem_cap))

    grid = (n_pad // tile_t, dff_p // tile_f)

    out = pl.pallas_call(
        kernel,
        out_shape=jax.ShapeDtypeStruct((n_pad, dm_p), x.dtype),
        grid_spec=pltpu.PrefetchScalarGridSpec(
            num_scalar_prefetch=1,                   # dropout seed -> SMEM
            grid=grid,
            in_specs=[
                pl.BlockSpec((tile_t, dm_p), lambda i, j, s: (i, 0)),   # x tile (fetched once per i)
                pl.BlockSpec((dm_p, tile_f), lambda i, j, s: (0, j)),   # w1 chunk (streamed)
                pl.BlockSpec((1, tile_f),    lambda i, j, s: (0, j)),   # b1 chunk
                pl.BlockSpec((tile_f, dm_p), lambda i, j, s: (j, 0)),   # w2 chunk (streamed)
                pl.BlockSpec((1, dm_p),      lambda i, j, s: (0, 0)),   # b2 (resident)
            ],
            out_specs=pl.BlockSpec((tile_t, dm_p), lambda i, j, s: (i, 0)),
            scratch_shapes=[pltpu.VMEM((tile_t, dm_p), jnp.float32)],
        ),
        compiler_params=pltpu.CompilerParams(
            dimension_semantics=("parallel", "arbitrary"),
            vmem_limit_bytes=vmem_limit),
    )(seed_arr, x2, w1p, b1p, w2p, b2p)

    return out[:n, :d_model].reshape(*orig_shape[:-1], d_model)


if __name__ == "__main__":
    def ref_ffn(x, w1, b1, w2, b2):
        hp = jax.lax.Precision.HIGHEST
        h = jnp.maximum(jnp.dot(x, w1, precision=hp) + b1, 0.0)
        return jnp.dot(h, w2, precision=hp) + b2

    def make_params(key, d_model, d_ff):
        kw1, kb1, kw2, kb2 = jax.random.split(key, 4)
        lim1 = 1.0 / math.sqrt(d_model)       # nn.Linear default init range
        lim2 = 1.0 / math.sqrt(d_ff)
        w1 = jax.random.uniform(kw1, (d_model, d_ff), jnp.float32, -lim1, lim1)
        b1 = jax.random.uniform(kb1, (d_ff,), jnp.float32, -lim1, lim1)
        w2 = jax.random.uniform(kw2, (d_ff, d_model), jnp.float32, -lim2, lim2)
        b2 = jax.random.uniform(kb2, (d_model,), jnp.float32, -lim2, lim2)
        return w1, b1, w2, b2

    key = jax.random.PRNGKey(0)
    k1, k2, k3, k4 = jax.random.split(key, 4)
    dropout_p = 0.1

    # 1) small eval-mode forward (dropout = identity) vs pure-JAX reference.
    d_model, d_ff, batch, seq = 128, 256, 2, 8
    w1, b1, w2, b2 = make_params(k1, d_model, d_ff)
    x = jax.random.normal(k2, (batch, seq, d_model), jnp.float32)
    out = jax.block_until_ready(
        feed_forward_block(x, w1, b1, w2, b2, dropout_p=dropout_p, training=False))
    ref = ref_ffn(x, w1, b1, w2, b2)
    assert out.shape == (batch, seq, d_model), out.shape
    assert jnp.allclose(out, ref, atol=2e-2, rtol=2e-2), "eval-mode mismatch vs reference"

    # 2) multi-tile eval-mode check (exercises both grid axes + d_model padding 96->128).
    d_model2, d_ff2, batch2, seq2 = 96, 1024, 2, 256          # grid = (2 token, 2 d_ff)
    w1b, b1b, w2b, b2b = make_params(k3, d_model2, d_ff2)
    xb = jax.random.normal(k4, (batch2, seq2, d_model2), jnp.float32)
    outb = jax.block_until_ready(
        feed_forward_block(xb, w1b, b1b, w2b, b2b, dropout_p=dropout_p, training=False))
    refb = ref_ffn(xb, w1b, b1b, w2b, b2b)
    assert outb.shape == (batch2, seq2, d_model2)
    assert jnp.allclose(outb, refb, atol=2e-2, rtol=2e-2), "multi-tile mismatch vs reference"

    # 3) training-mode forward (in-kernel hash-PRNG dropout): smoke test only
    #    (mask stream intentionally differs from torch's RNG by construction).
    out_tr = jax.block_until_ready(
        feed_forward_block(xb, w1b, b1b, w2b, b2b,
                           dropout_p=dropout_p, training=True, seed=42))
    assert out_tr.shape == (batch2, seq2, d_model2)
    assert bool(jnp.all(jnp.isfinite(out_tr)))
    assert not bool(jnp.allclose(out_tr, refb, atol=1e-4)), "dropout had no effect"

    # 4) bf16 smoke test (bf16-native MXU path; accumulation stays f32).
    out_bf16 = jax.block_until_ready(
        feed_forward_block(x.astype(jnp.bfloat16),
                           w1.astype(jnp.bfloat16), b1.astype(jnp.bfloat16),
                           w2.astype(jnp.bfloat16), b2.astype(jnp.bfloat16),
                           dropout_p=dropout_p, training=False))
    assert out_bf16.shape == (batch, seq, d_model)
    assert bool(jnp.all(jnp.isfinite(out_bf16.astype(jnp.float32))))

    print("KERNEL_OK")
</pallas_src>

<mosaic_0001>
module attributes {stable_mosaic.version = 11 : i64} {
  func.func @_ffn_kernel(%arg0: i32, %arg1: i32, %arg2: memref<1xi32, #tpu.memory_space<smem>>, %arg3: memref<16x128xf32, #tpu.memory_space<vmem>>, %arg4: memref<128x256xf32, #tpu.memory_space<vmem>>, %arg5: memref<1x256xf32, #tpu.memory_space<vmem>>, %arg6: memref<256x128xf32, #tpu.memory_space<vmem>>, %arg7: memref<1x128xf32, #tpu.memory_space<vmem>>, %arg8: memref<16x128xf32, #tpu.memory_space<vmem>>, %arg9: memref<16x128xf32, #tpu.memory_space<vmem>>) attributes {dimension_semantics = [#tpu.dimension_semantics<parallel>, #tpu.dimension_semantics<arbitrary>], iteration_bounds = array<i64: 1, 1>, scalar_prefetch = 1 : i64, scratch_operands = 1 : i64, tpu.core_type = #tpu.core_type<tc>, window_params = [{transform_indices = @transform_0, window_bounds = array<i64: 16, 128>}, {transform_indices = @transform_1, window_bounds = array<i64: 128, 256>}, {transform_indices = @transform_2, window_bounds = array<i64: 1, 256>}, {transform_indices = @transform_3, window_bounds = array<i64: 256, 128>}, {pipeline_mode = #tpu.pipeline_mode<synchronous>, transform_indices = @transform_4, window_bounds = array<i64: 1, 128>}, {transform_indices = @transform_5, window_bounds = array<i64: 16, 128>}]} {
    %c0_i32 = arith.constant 0 : i32
    %0 = arith.cmpi eq, %arg1, %c0_i32 : i32
    %1 = arith.extui %0 : i1 to i32
    %c0_i32_0 = arith.constant 0 : i32
    %2 = arith.cmpi ne, %1, %c0_i32_0 : i32
    scf.if %2 {
      %cst_16 = arith.constant 0.000000e+00 : f32
      %19 = vector.broadcast %cst_16 : f32 to vector<16x128xf32>
      %c0_17 = arith.constant 0 : index
      %c0_18 = arith.constant 0 : index
      %20 = vector.load %arg9[%c0_17, %c0_18] : memref<16x128xf32, #tpu.memory_space<vmem>>, vector<16x128xf32>
      tpu.vector_store %arg9[%c0_17, %c0_18], %19 {strides = array<i32>} : memref<16x128xf32, #tpu.memory_space<vmem>>, vector<16x128xf32>,
    } else {
    }
    %c0 = arith.constant 0 : index
    %c0_1 = arith.constant 0 : index
    %3 = vector.load %arg3[%c0, %c0_1] : memref<16x128xf32, #tpu.memory_space<vmem>>, vector<16x128xf32>
    %c0_2 = arith.constant 0 : index
    %c0_3 = arith.constant 0 : index
    %4 = vector.load %arg4[%c0_2, %c0_3] : memref<128x256xf32, #tpu.memory_space<vmem>>, vector<128x256xf32>
    %cst = arith.constant dense<0.000000e+00> : vector<16x256xf32>
    %5 = tpu.matmul %3, %4, %cst {dimension_numbers = #tpu.dot_dimension_numbers<[1], [0], [0], [1], [0, 0, 1, 1], [], []>} : vector<16x128xf32>, vector<128x256xf32>, vector<16x256xf32> -> vector<16x256xf32>
    %c0_4 = arith.constant 0 : index
    %c0_5 = arith.constant 0 : index
    %6 = vector.load %arg5[%c0_4, %c0_5] : memref<1x256xf32, #tpu.memory_space<vmem>>, vector<1x256xf32>
    %7 = vector.broadcast %6 : vector<1x256xf32> to vector<16x256xf32>
    %8 = arith.addf %5, %7 : vector<16x256xf32>
    %cst_6 = arith.constant 0.000000e+00 : f32
    %9 = vector.broadcast %cst_6 : f32 to vector<16x256xf32>
    %10 = arith.maximumf %8, %9 : vector<16x256xf32>
    %c0_7 = arith.constant 0 : index
    %c0_8 = arith.constant 0 : index
    %11 = vector.load %arg9[%c0_7, %c0_8] : memref<16x128xf32, #tpu.memory_space<vmem>>, vector<16x128xf32>
    %c0_9 = arith.constant 0 : index
    %c0_10 = arith.constant 0 : index
    %12 = vector.load %arg6[%c0_9, %c0_10] : memref<256x128xf32, #tpu.memory_space<vmem>>, vector<256x128xf32>
    %cst_11 = arith.constant dense<0.000000e+00> : vector<16x128xf32>
    %13 = tpu.matmul %10, %12, %cst_11 {dimension_numbers = #tpu.dot_dimension_numbers<[1], [0], [0], [1], [0, 0, 1, 1], [], []>} : vector<16x256xf32>, vector<256x128xf32>, vector<16x128xf32> -> vector<16x128xf32>
    %14 = arith.addf %11, %13 : vector<16x128xf32>
    %c0_12 = arith.constant 0 : index
    %c0_13 = arith.constant 0 : index
    %15 = vector.load %arg9[%c0_12, %c0_13] : memref<16x128xf32, #tpu.memory_space<vmem>>, vector<16x128xf32>
    tpu.vector_store %arg9[%c0_12, %c0_13], %14 {strides = array<i32>} : memref<16x128xf32, #tpu.memory_space<vmem>>, vector<16x128xf32>,
    %c0_i32_14 = arith.constant 0 : i32
    %16 = arith.cmpi eq, %arg1, %c0_i32_14 : i32
    %17 = arith.extui %16 : i1 to i32
    %c0_i32_15 = arith.constant 0 : i32
    %18 = arith.cmpi ne, %17, %c0_i32_15 : i32
    scf.if %18 {
      %c0_16 = arith.constant 0 : index
      %c0_17 = arith.constant 0 : index
      %19 = vector.load %arg9[%c0_16, %c0_17] : memref<16x128xf32, #tpu.memory_space<vmem>>, vector<16x128xf32>
      %c0_18 = arith.constant 0 : index
      %c0_19 = arith.constant 0 : index
      %20 = vector.load %arg7[%c0_18, %c0_19] : memref<1x128xf32, #tpu.memory_space<vmem>>, vector<1x128xf32>
      %21 = vector.broadcast %20 : vector<1x128xf32> to vector<16x128xf32>
      %22 = arith.addf %19, %21 : vector<16x128xf32>
      %c0_20 = arith.constant 0 : index
      %c0_21 = arith.constant 0 : index
      %23 = vector.load %arg8[%c0_20, %c0_21] : memref<16x128xf32, #tpu.memory_space<vmem>>, vector<16x128xf32>
      tpu.vector_store %arg8[%c0_20, %c0_21], %22 {strides = array<i32>} : memref<16x128xf32, #tpu.memory_space<vmem>>, vector<16x128xf32>,
    } else {
    }
    return
  }
  func.func @transform_0(%arg0: i32, %arg1: i32, %arg2: memref<1xi32, #tpu.memory_space<smem>>) -> (i32, i32) {
    %c0_i32 = arith.constant 0 : i32
    %c0_i32_0 = arith.constant 0 : i32
    return %arg0, %c0_i32 : i32, i32
  }
  func.func @transform_1(%arg0: i32, %arg1: i32, %arg2: memref<1xi32, #tpu.memory_space<smem>>) -> (i32, i32) {
    %c0_i32 = arith.constant 0 : i32
    %c0_i32_0 = arith.constant 0 : i32
    return %c0_i32, %arg1 : i32, i32
  }
  func.func @transform_2(%arg0: i32, %arg1: i32, %arg2: memref<1xi32, #tpu.memory_space<smem>>) -> (i32, i32) {
    %c0_i32 = arith.constant 0 : i32
    %c0_i32_0 = arith.constant 0 : i32
    return %c0_i32, %arg1 : i32, i32
  }
  func.func @transform_3(%arg0: i32, %arg1: i32, %arg2: memref<1xi32, #tpu.memory_space<smem>>) -> (i32, i32) {
    %c0_i32 = arith.constant 0 : i32
    %c0_i32_0 = arith.constant 0 : i32
    return %arg1, %c0_i32 : i32, i32
  }
  func.func @transform_4(%arg0: i32, %arg1: i32, %arg2: memref<1xi32, #tpu.memory_space<smem>>) -> (i32, i32) {
    %c0_i32 = arith.constant 0 : i32
    %c0_i32_0 = arith.constant 0 : i32
    %c0_i32_1 = arith.constant 0 : i32
    return %c0_i32, %c0_i32_0 : i32, i32
  }
  func.func @transform_5(%arg0: i32, %arg1: i32, %arg2: memref<1xi32, #tpu.memory_space<smem>>) -> (i32, i32) {
    %c0_i32 = arith.constant 0 : i32
    %c0_i32_0 = arith.constant 0 : i32
    return %arg0, %c0_i32 : i32, i32
  }
}

</mosaic_0001>

<llo_original>
// kernel: tpu_custom_call.1
$region0: #{tpu_custom_call.1}
  #allocation0 [shape = 'u32[]', space=smem, size = 0x4, offset = 0x4, fixed_abs, tag = 'smem constant byte address 0x4 - core index']
  #allocation1 [shape = 'u32[144,128]{1,0:T(1,128)}', space=vmem, size = 0x12000, scoped, tag = 'internal scratch']
  #allocation2 [shape = 'f32[16,128]{1,0:T(8,128)}', space=vmem, size = 0x2000, scoped, tag = 'scratch operand']
  #allocation3 [shape = 's32[1]{0}', space=sflag, size = 0x4, scoped, tag = 'scoped memory for tpu_custom_call.1']
  #allocation4 [shape = 's32[1]{0:T(128)S(6)}', space=smem, size = 0x200, scoped, tag = 'prefetched SMEM operand 0']
  %s0 = inlined_call_operand.<no memory space> [shape: s32[1], index: 0, kind: input, shape index: {}]
  %s1 = inlined_call_operand.hbm [shape: f32[16,128], index: 1, kind: input, shape index: {}]
  %s2 = inlined_call_operand.hbm [shape: f32[128,256], index: 2, kind: input, shape index: {}]
  %s3 = inlined_call_operand.vmem [shape: f32[1,256], index: 3, kind: input, shape index: {}]
  %s4 = inlined_call_operand.hbm [shape: f32[256,128], index: 4, kind: input, shape index: {}]
  %s5 = inlined_call_operand.vmem [shape: f32[1,128], index: 5, kind: input, shape index: {}]
  %s6 = inlined_call_operand.hbm [shape: f32[16,128], index: 6, kind: output, shape index: {}]
  %s7 = sld [smem:[#allocation0]]
  $region50: #{tpu_custom_call.1} parent=0
    _
  %s9 = ssub.s32 1, %s7
  %s10 = scalar_select 0, %s9, %s7
  %11 = sst [smem:[#allocation4]] %s0
  $region1: #{tpu_custom_call.1} parent=0
    #allocation5 [shape = 'u8[8192]{0}', space=vmem, size = 0x2000, scoped, tag = 'input window, operand 1, single buffered']
    #allocation6 [shape = 's32[1]{0}', space=sflag, size = 0x4, scoped, tag = 'scoped memory for tpu_custom_call.1']
    #allocation7 [shape = 's32[1]{0}', space=sflag, size = 0x4, scoped, tag = 'scoped memory for tpu_custom_call.1']
    #allocation8 [shape = 'u8[131072]{0}', space=vmem, size = 0x20000, scoped, tag = 'input window, operand 2, single buffered']
    #allocation9 [shape = 's32[1]{0}', space=sflag, size = 0x4, scoped, tag = 'scoped memory for tpu_custom_call.1']
    #allocation10 [shape = 'u8[131072]{0}', space=vmem, size = 0x20000, scoped, tag = 'input window, operand 4, single buffered']
    #allocation11 [shape = 'u8[8192]{0}', space=vmem, size = 0x2000, scoped, tag = 'output window, operand 0, single buffered']
    %12 = vsyncpa [#allocation6], 0
    %13 = vsyncpa [#allocation9], 0
    %14 = vsyncpa [#allocation7], 0
    // Predicated region
    $region2: #{tpu_custom_call.1} parent=1 // pred_check
      _
    $region3: #{tpu_custom_call.1} parent=1 // pred_check_branch
      %16 = sbr.rel (0) target = $region5
    $region4: #{tpu_custom_call.1} parent=1 // pred_region
      %s18 = ssub.s32 256, 256
      %19 = vsyncadd [#allocation6], %s18
      %s20 = sshll.u32 [#allocation5], 4
      %s21 = int_to_ptr.vmem [resolvable:$true] %s20
      %26 = dma.hbm_to_vmem [thread:$0]  %s1, 256, %s21, [#allocation6], 128, 128, 8
    $region5: #{tpu_custom_call.1} parent=1 // pred_fallthru
      _
    // Predicated region
    $region6: #{tpu_custom_call.1} parent=1 // pred_check
      _
    $region7: #{tpu_custom_call.1} parent=1 // pred_check_branch
      %28 = sbr.rel (0) target = $region9
    $region8: #{tpu_custom_call.1} parent=1 // pred_region
      %s30 = ssub.s32 4096, 4096
      %31 = vsyncadd [#allocation9], %s30
      %s32 = sshll.u32 [#allocation8], 4
      %s33 = int_to_ptr.vmem [resolvable:$true] %s32
      %38 = dma.hbm_to_vmem [thread:$0]  %s2, 4096, %s33, [#allocation9], 256, 256, 16
    $region9: #{tpu_custom_call.1} parent=1 // pred_fallthru
      _
    // Predicated region
    $region10: #{tpu_custom_call.1} parent=1 // pred_check
      _
    $region11: #{tpu_custom_call.1} parent=1 // pred_check_branch
      %40 = sbr.rel (0) target = $region13
    $region12: #{tpu_custom_call.1} parent=1 // pred_region
      _
    $region13: #{tpu_custom_call.1} parent=1 // pred_fallthru
      _
    // Predicated region
    $region14: #{tpu_custom_call.1} parent=1 // pred_check
      _
    $region15: #{tpu_custom_call.1} parent=1 // pred_check_branch
      %42 = sbr.rel (0) target = $region17
    $region16: #{tpu_custom_call.1} parent=1 // pred_region
      %s44 = ssub.s32 4096, 4096
      %45 = vsyncadd [#allocation9], %s44
      %s46 = sshll.u32 [#allocation10], 4
      %s47 = int_to_ptr.vmem [resolvable:$true] %s46
      %52 = dma.hbm_to_vmem [thread:$0]  %s4, 4096, %s47, [#allocation9], 128, 128, 8
    $region17: #{tpu_custom_call.1} parent=1 // pred_fallthru
      _
    // Predicated region
    $region18: #{tpu_custom_call.1} parent=1 // pred_check
      _
    $region19: #{tpu_custom_call.1} parent=1 // pred_check_branch
      %54 = sbr.rel (0) target = $region21
    $region20: #{tpu_custom_call.1} parent=1 // pred_region
      _
    $region21: #{tpu_custom_call.1} parent=1 // pred_fallthru
      _
    // Predicated region
    $region22: #{tpu_custom_call.1} parent=1 // pred_check
      _
    $region23: #{tpu_custom_call.1} parent=1 // pred_check_branch
      %56 = sbr.rel (0) target = $region25
    $region24: #{tpu_custom_call.1} parent=1 // pred_region
      %57 = dma.done [#allocation6], 256
    $region25: #{tpu_custom_call.1} parent=1 // pred_fallthru
      _
    // Predicated region
    $region26: #{tpu_custom_call.1} parent=1 // pred_check
      _
    $region27: #{tpu_custom_call.1} parent=1 // pred_check_branch
      %59 = sbr.rel (0) target = $region29
    $region28: #{tpu_custom_call.1} parent=1 // pred_region
      %60 = dma.done [#allocation9], 4096
    $region29: #{tpu_custom_call.1} parent=1 // pred_fallthru
      _
    // Predicated region
    $region30: #{tpu_custom_call.1} parent=1 // pred_check
      _
    $region31: #{tpu_custom_call.1} parent=1 // pred_check_branch
      %62 = sbr.rel (0) target = $region33
    $region32: #{tpu_custom_call.1} parent=1 // pred_region
      %63 = dma.done [#allocation9], 4096
    $region33: #{tpu_custom_call.1} parent=1 // pred_fallthru
      _
    %p64 = scmp.eq.s32.totalorder 0, 0
    // Predicated region
    $region34: #{tpu_custom_call.1} parent=1 // pred_check
      %p65 = pneg %p64
    $region35: #{tpu_custom_call.1} parent=1 // pred_check_branch
      %67 = sbr.rel (%p65) target = $region37
    $region36: #{tpu_custom_call.1} parent=1 // pred_region
      %68 = vst [vmem:[#allocation2] sm:$0xff] 0.0
      %69 = vst [vmem:[#allocation2 + $0x8] sm:$0xff] 0.0
    $region37: #{tpu_custom_call.1} parent=1 // pred_fallthru
      _
    %v70 = vld [vmem:[#allocation5] sm:$0xff]
    %v71 = vld [vmem:[#allocation5 + $0x8] sm:$0xff]
    %v72 = vld [vmem:[#allocation8] sm:$0xff]
    %v73 = vld [vmem:[#allocation8 + $0x8] sm:$0xff]
    %v74 = vld [vmem:[#allocation8 + $0x10] sm:$0xff]
    %v75 = vld [vmem:[#allocation8 + $0x18] sm:$0xff]
    %v76 = vld [vmem:[#allocation8 + $0x20] sm:$0xff]
    %v77 = vld [vmem:[#allocation8 + $0x28] sm:$0xff]
    %v78 = vld [vmem:[#allocation8 + $0x30] sm:$0xff]
    %v79 = vld [vmem:[#allocation8 + $0x38] sm:$0xff]
    %v80 = vld [vmem:[#allocation8 + $0x40] sm:$0xff]
    %v81 = vld [vmem:[#allocation8 + $0x48] sm:$0xff]
    %v82 = vld [vmem:[#allocation8 + $0x50] sm:$0xff]
    %v83 = vld [vmem:[#allocation8 + $0x58] sm:$0xff]
    %v84 = vld [vmem:[#allocation8 + $0x60] sm:$0xff]
    %v85 = vld [vmem:[#allocation8 + $0x68] sm:$0xff]
    %v86 = vld [vmem:[#allocation8 + $0x70] sm:$0xff]
    %v87 = vld [vmem:[#allocation8 + $0x78] sm:$0xff]
    %v88 = vld [vmem:[#allocation8 + $0x80] sm:$0xff]
    %v89 = vld [vmem:[#allocation8 + $0x88] sm:$0xff]
    %v90 = vld [vmem:[#allocation8 + $0x90] sm:$0xff]
    %v91 = vld [vmem:[#allocation8 + $0x98] sm:$0xff]
    %v92 = vld [vmem:[#allocation8 + $0xa0] sm:$0xff]
    %v93 = vld [vmem:[#allocation8 + $0xa8] sm:$0xff]
    %v94 = vld [vmem:[#allocation8 + $0xb0] sm:$0xff]
    %v95 = vld [vmem:[#allocation8 + $0xb8] sm:$0xff]
    %v96 = vld [vmem:[#allocation8 + $0xc0] sm:$0xff]
    %v97 = vld [vmem:[#allocation8 + $0xc8] sm:$0xff]
    %v98 = vld [vmem:[#allocation8 + $0xd0] sm:$0xff]
    %v99 = vld [vmem:[#allocation8 + $0xd8] sm:$0xff]
    %v100 = vld [vmem:[#allocation8 + $0xe0] sm:$0xff]
    %v101 = vld [vmem:[#allocation8 + $0xe8] sm:$0xff]
    %v102 = vld [vmem:[#allocation8 + $0xf0] sm:$0xff]
    %v103 = vld [vmem:[#allocation8 + $0xf8] sm:$0xff]
    %v104 = vld [vmem:[%s3] sm:$0x3]
    %v106 = vlaneseq
    %v107 = vshrl.u32 %v106, 7
    %v108 = vsub.s32 0, %v107
    %v109 = vrot.slane %v104, %v108
    %v110 = vlaneseq
    %v111 = vshrl.u32 %v110, 7
    %v112 = vsub.s32 1, %v111
    %v113 = vrot.slane %v104, %v112
    %116 = vmatprep.subr.mxu0 %v73
    %117 = vmatpush1.msra.mxu0 %v72
    %118 = vmatprep.subr.mxu0 %v75
    %119 = vmatpush1.msra.mxu0 %v74
    %120 = vmatprep.subr.mxu0 %v77
    %121 = vmatpush1.msra.mxu0 %v76
    %122 = vmatprep.subr.mxu0 %v79
    %123 = vmatpush1.msra.mxu0 %v78
    %124 = vmatprep.subr.mxu0 %v81
    %125 = vmatpush1.msra.mxu0 %v80
    %126 = vmatprep.subr.mxu0 %v83
    %127 = vmatpush1.msra.mxu0 %v82
    %128 = vmatprep.subr.mxu0 %v85
    %129 = vmatpush1.msra.mxu0 %v84
    %130 = vmatprep.subr.mxu0 %v87
    %131 = vmatpush1.msra.mxu0 %v86
    %132 = vmatprep.subr.mxu0 %v89
    %133 = vmatpush1.msra.mxu0 %v88
    %134 = vmatprep.subr.mxu0 %v91
    %135 = vmatpush1.msra.mxu0 %v90
    %136 = vmatprep.subr.mxu0 %v93
    %137 = vmatpush1.msra.mxu0 %v92
    %138 = vmatprep.subr.mxu0 %v95
    %139 = vmatpush1.msra.mxu0 %v94
    %140 = vmatprep.subr.mxu0 %v97
    %141 = vmatpush1.msra.mxu0 %v96
    %142 = vmatprep.subr.mxu0 %v99
    %143 = vmatpush1.msra.mxu0 %v98
    %144 = vmatprep.subr.mxu0 %v101
    %145 = vmatpush1.msra.mxu0 %v100
    %146 = vmatprep.subr.mxu0 %v103
    %147 = vmatpush1.msra.mxu0 %v102
    %148 = vmatprep.subr.mxu0 0.0
    %149 = vmatpush1.msra.mxu0 0.0
    %150 = vmatprep.subr.mxu0 0.0
    %151 = vmatpush1.msra.mxu0 0.0
    %152 = vmatprep.subr.mxu0 0.0
    %153 = vmatpush1.msra.mxu0 0.0
    %154 = vmatprep.subr.mxu0 0.0
    %155 = vmatpush1.msra.mxu0 0.0
    %156 = vmatprep.subr.mxu0 0.0
    %157 = vmatpush1.msra.mxu0 0.0
    %158 = vmatprep.subr.mxu0 0.0
    %159 = vmatpush1.msra.mxu0 0.0
    %160 = vmatprep.subr.mxu0 0.0
    %161 = vmatpush1.msra.mxu0 0.0
    %162 = vmatprep.subr.mxu0 0.0
    %163 = vmatpush1.msra.mxu0 0.0
    %164 = vmatprep.subr.mxu0 0.0
    %165 = vmatpush1.msra.mxu0 0.0
    %166 = vmatprep.subr.mxu0 0.0
    %167 = vmatpush1.msra.mxu0 0.0
    %168 = vmatprep.subr.mxu0 0.0
    %169 = vmatpush1.msra.mxu0 0.0
    %170 = vmatprep.subr.mxu0 0.0
    %171 = vmatpush1.msra.mxu0 0.0
    %172 = vmatprep.subr.mxu0 0.0
    %173 = vmatpush1.msra.mxu0 0.0
    %174 = vmatprep.subr.mxu0 0.0
    %175 = vmatpush1.msra.mxu0 0.0
    %176 = vmatprep.subr.mxu0 0.0
    %177 = vmatpush1.msra.mxu0 0.0
    %178 = vmatprep.subr.mxu0 0.0
    %179 = vmatpush1.msra.mxu0 0.0
    %180 = vmatprep.mubr.f32.mxu0 0.0
    %181 = vmatmul.mubr.f32.gmra.mrb[0].mxu0 %v70
    %v182 = vpop.f32.mrb[0].mxu0
    %v183 = vadd.f32 %v109, %v182
    %v184 = vpop.f32.mrb[0].mxu0
    %v185 = vadd.f32 %v113, %v184
    %186 = vmatprep.mubr.f32.mxu0 0.0
    %187 = vmatmul.mubr.f32.gmra.mrb[0].mxu0 %v71
    %v188 = vpop.f32.mrb[0].mxu0
    %v189 = vadd.f32 %v109, %v188
    %v190 = vpop.f32.mrb[0].mxu0
    %v191 = vadd.f32 %v113, %v190
    %192 = vdwg.mxu0
    %v193 = vmax.f32 %v183, 0.0
    %v194 = vmax.f32 %v185, 0.0
    %v195 = vmax.f32 %v189, 0.0
    %v196 = vmax.f32 %v191, 0.0
    %v197 = vld [vmem:[#allocation2] sm:$0xff]
    %v198 = vld [vmem:[#allocation2 + $0x8] sm:$0xff]
    %v199 = vld [vmem:[#allocation10] sm:$0xff]
    %v200 = vld [vmem:[#allocation10 + $0x8] sm:$0xff]
    %v201 = vld [vmem:[#allocation10 + $0x10] sm:$0xff]
    %v202 = vld [vmem:[#allocation10 + $0x18] sm:$0xff]
    %v203 = vld [vmem:[#allocation10 + $0x20] sm:$0xff]
    %v204 = vld [vmem:[#allocation10 + $0x28] sm:$0xff]
    %v205 = vld [vmem:[#allocation10 + $0x30] sm:$0xff]
    %v206 = vld [vmem:[#allocation10 + $0x38] sm:$0xff]
    %v207 = vld [vmem:[#allocation10 + $0x40] sm:$0xff]
    %v208 = vld [vmem:[#allocation10 + $0x48] sm:$0xff]
    %v209 = vld [vmem:[#allocation10 + $0x50] sm:$0xff]
    %v210 = vld [vmem:[#allocation10 + $0x58] sm:$0xff]
    %v211 = vld [vmem:[#allocation10 + $0x60] sm:$0xff]
    %v212 = vld [vmem:[#allocation10 + $0x68] sm:$0xff]
    %v213 = vld [vmem:[#allocation10 + $0x70] sm:$0xff]
    %v214 = vld [vmem:[#allocation10 + $0x78] sm:$0xff]
    %v215 = vld [vmem:[#allocation10 + $0x80] sm:$0xff]
    %v216 = vld [vmem:[#allocation10 + $0x88] sm:$0xff]
    %v217 = vld [vmem:[#allocation10 + $0x90] sm:$0xff]
    %v218 = vld [vmem:[#allocation10 + $0x98] sm:$0xff]
    %v219 = vld [vmem:[#allocation10 + $0xa0] sm:$0xff]
    %v220 = vld [vmem:[#allocation10 + $0xa8] sm:$0xff]
    %v221 = vld [vmem:[#allocation10 + $0xb0] sm:$0xff]
    %v222 = vld [vmem:[#allocation10 + $0xb8] sm:$0xff]
    %v223 = vld [vmem:[#allocation10 + $0xc0] sm:$0xff]
    %v224 = vld [vmem:[#allocation10 + $0xc8] sm:$0xff]
    %v225 = vld [vmem:[#allocation10 + $0xd0] sm:$0xff]
    %v226 = vld [vmem:[#allocation10 + $0xd8] sm:$0xff]
    %v227 = vld [vmem:[#allocation10 + $0xe0] sm:$0xff]
    %v228 = vld [vmem:[#allocation10 + $0xe8] sm:$0xff]
    %v229 = vld [vmem:[#allocation10 + $0xf0] sm:$0xff]
    %v230 = vld [vmem:[#allocation10 + $0xf8] sm:$0xff]
    %231 = vmatprep.subr.mxu0 0.0
    %232 = vmatpush1.msra.mxu0 %v199
    %233 = vmatprep.subr.mxu0 0.0
    %234 = vmatpush1.msra.mxu0 %v200
    %235 = vmatprep.subr.mxu0 0.0
    %236 = vmatpush1.msra.mxu0 %v201
    %237 = vmatprep.subr.mxu0 0.0
    %238 = vmatpush1.msra.mxu0 %v202
    %239 = vmatprep.subr.mxu0 0.0
    %240 = vmatpush1.msra.mxu0 %v203
    %241 = vmatprep.subr.mxu0 0.0
    %242 = vmatpush1.msra.mxu0 %v204
    %243 = vmatprep.subr.mxu0 0.0
    %244 = vmatpush1.msra.mxu0 %v205
    %245 = vmatprep.subr.mxu0 0.0
    %246 = vmatpush1.msra.mxu0 %v206
    %247 = vmatprep.subr.mxu0 0.0
    %248 = vmatpush1.msra.mxu0 %v207
    %249 = vmatprep.subr.mxu0 0.0
    %250 = vmatpush1.msra.mxu0 %v208
    %251 = vmatprep.subr.mxu0 0.0
    %252 = vmatpush1.msra.mxu0 %v209
    %253 = vmatprep.subr.mxu0 0.0
    %254 = vmatpush1.msra.mxu0 %v210
    %255 = vmatprep.subr.mxu0 0.0
    %256 = vmatpush1.msra.mxu0 %v211
    %257 = vmatprep.subr.mxu0 0.0
    %258 = vmatpush1.msra.mxu0 %v212
    %259 = vmatprep.subr.mxu0 0.0
    %260 = vmatpush1.msra.mxu0 %v213
    %261 = vmatprep.subr.mxu0 0.0
    %262 = vmatpush1.msra.mxu0 %v214
    %263 = vmatprep.subr.mxu0 0.0
    %264 = vmatpush1.msra.mxu0 %v215
    %265 = vmatprep.subr.mxu0 0.0
    %266 = vmatpush1.msra.mxu0 %v216
    %267 = vmatprep.subr.mxu0 0.0
    %268 = vmatpush1.msra.mxu0 %v217
    %269 = vmatprep.subr.mxu0 0.0
    %270 = vmatpush1.msra.mxu0 %v218
    %271 = vmatprep.subr.mxu0 0.0
    %272 = vmatpush1.msra.mxu0 %v219
    %273 = vmatprep.subr.mxu0 0.0
    %274 = vmatpush1.msra.mxu0 %v220
    %275 = vmatprep.subr.mxu0 0.0
    %276 = vmatpush1.msra.mxu0 %v221
    %277 = vmatprep.subr.mxu0 0.0
    %278 = vmatpush1.msra.mxu0 %v222
    %279 = vmatprep.subr.mxu0 0.0
    %280 = vmatpush1.msra.mxu0 %v223
    %281 = vmatprep.subr.mxu0 0.0
    %282 = vmatpush1.msra.mxu0 %v224
    %283 = vmatprep.subr.mxu0 0.0
    %284 = vmatpush1.msra.mxu0 %v225
    %285 = vmatprep.subr.mxu0 0.0
    %286 = vmatpush1.msra.mxu0 %v226
    %287 = vmatprep.subr.mxu0 0.0
    %288 = vmatpush1.msra.mxu0 %v227
    %289 = vmatprep.subr.mxu0 0.0
    %290 = vmatpush1.msra.mxu0 %v228
    %291 = vmatprep.subr.mxu0 0.0
    %292 = vmatpush1.msra.mxu0 %v229
    %293 = vmatprep.subr.mxu0 0.0
    %294 = vmatpush1.msra.mxu0 %v230
    %295 = vmatprep.mubr.f32.mxu0 %v194
    %296 = vmatmul.mubr.f32.gmra.mrb[0].mxu0 %v193
    %v297 = vpop.f32.mrb[0].mxu0
    %v298 = vadd.f32 0.0, %v297
    %v299 = vpop.f32.mrb[0].mxu0
    %300 = vmatprep.mubr.f32.mxu0 %v196
    %301 = vmatmul.mubr.f32.gmra.mrb[0].mxu0 %v195
    %v302 = vpop.f32.mrb[0].mxu0
    %v303 = vadd.f32 0.0, %v302
    %v304 = vpop.f32.mrb[0].mxu0
    %305 = vdwg.mxu0
    %v306 = vadd.f32 %v197, %v298
    %v307 = vadd.f32 %v198, %v303
    %308 = vst [vmem:[#allocation2] sm:$0xff] %v306
    %309 = vst [vmem:[#allocation2 + $0x8] sm:$0xff] %v307
    // Predicated region
    $region38: #{tpu_custom_call.1} parent=1 // pred_check
      %p310 = pneg %p64
    $region39: #{tpu_custom_call.1} parent=1 // pred_check_branch
      %312 = sbr.rel (%p310) target = $region41
    $region40: #{tpu_custom_call.1} parent=1 // pred_region
      %v313 = vld [vmem:[#allocation2] sm:$0xff]
      %v314 = vld [vmem:[#allocation2 + $0x8] sm:$0xff]
      %v315 = vld [vmem:[%s5] sm:$0x1]
      %v317 = vlaneseq
      %v318 = vshrl.u32 %v317, 7
      %v319 = vsub.s32 0, %v318
      %v320 = vrot.slane %v315, %v319
      %v322 = vadd.f32 %v313, %v320
      %v323 = vadd.f32 %v314, %v320
      %324 = vst [vmem:[#allocation11] sm:$0xff] %v322
      %325 = vst [vmem:[#allocation11 + $0x8] sm:$0xff] %v323
    $region41: #{tpu_custom_call.1} parent=1 // pred_fallthru
      _
    // Predicated region
    $region42: #{tpu_custom_call.1} parent=1 // pred_check
      _
    $region43: #{tpu_custom_call.1} parent=1 // pred_check_branch
      %327 = sbr.rel (0) target = $region45
    $region44: #{tpu_custom_call.1} parent=1 // pred_region
      %s329 = ssub.s32 256, 256
      %330 = vsyncadd [#allocation7], %s329
      %s331 = sshll.u32 [#allocation11], 4
      %s332 = int_to_ptr.vmem [resolvable:$true] %s331
      %337 = dma.vmem_to_hbm [thread:$0]  %s332, 256, %s6, [#allocation7], 128, 128, 8
    $region45: #{tpu_custom_call.1} parent=1 // pred_fallthru
      _
    // Predicated region
    $region46: #{tpu_custom_call.1} parent=1 // pred_check
      _
    $region47: #{tpu_custom_call.1} parent=1 // pred_check_branch
      %339 = sbr.rel (0) target = $region49
    $region48: #{tpu_custom_call.1} parent=1 // pred_region
      %340 = dma.done [#allocation7], 256
    $region49: #{tpu_custom_call.1} parent=1 // pred_fallthru
      _
    %341 = vsyncpa [#allocation6], 1
    %342 = vsyncpa [#allocation9], 1
    %343 = vsyncpa [#allocation7], 1

</llo_original>
